<compile_context>
chip_gen: v7x
topology: tpu7x:2x2x1
jax: 0.10.0
libtpu: 0.0.40
codegen_flags: <defaults>
</compile_context>

<pallas_src>
import jax
import jax.numpy as jnp
from jax.experimental import pallas as pl
from jax.experimental.pallas import tpu as pltpu


def _wordle_nn_kernel(x_ref, w1t_ref, b1_ref, w2_ref, b2_ref, o_ref):
    # x_ref   : (block_b, F)  input dtype (f32 / bf16 / ...)
    # w1t_ref : (F, H)        float32   (fc1.weight, pre-transposed)
    # b1_ref  : (1, H)        float32
    # w2_ref  : (1, H)        float32   (fc2.weight as a row)
    # b2_ref  : (1, 1)        float32
    # o_ref   : (block_b, 1)  float32
    x = x_ref[...].astype(jnp.float32)          # no-op for f32; VPU upcast for bf16
    # fc1 on the MXU, f32 accumulation.
    h = jnp.dot(x, w1t_ref[...], preferred_element_type=jnp.float32)
    h = jnp.maximum(h + b1_ref[...], 0.0)       # bias + ReLU on the VPU
    # fc2 (H -> 1): VPU multiply + lane reduction (no N=1 MXU matvec).
    out = jnp.sum(h * w2_ref[...], axis=-1, keepdims=True) + b2_ref[...]
    o_ref[...] = out.astype(o_ref.dtype)


def prepare_wordle_params(w1, b1, w2, b2):
    """One-time parameter prep, hoisted out of the per-call forward path.

    w1: (H, F), b1: (H,), w2: (1, H), b2: (1,)  -- PyTorch Linear layouts.
    Returns (w1t (F,H) f32, b1 (1,H) f32, w2_row (1,H) f32, b2 (1,1) f32).
    """
    H, F = w1.shape
    w1t = jnp.asarray(w1, dtype=jnp.float32).T                 # (F, H)
    b1r = jnp.asarray(b1, dtype=jnp.float32).reshape(1, H)
    w2r = jnp.asarray(w2, dtype=jnp.float32).reshape(1, H)
    b2r = jnp.asarray(b2, dtype=jnp.float32).reshape(1, 1)
    return w1t, b1r, w2r, b2r


def wordle_nn_forward(x, w1t, b1r, w2r, b2r, *, block_b=1024):
    """Pallas forward pass: relu(x @ W1^T + b1) @ W2^T + b2.

    x: (B, F), any float dtype (streamed as-is; upcast in-kernel).
    Params as produced by prepare_wordle_params.  Returns (B, 1) float32.
    """
    B, F = x.shape
    H = w1t.shape[1]

    if B <= block_b:
        # Single full-array tile (exempt from the 8-row divisibility rule).
        block_b_eff = B
        num_tiles = 1
    else:
        # Multiple-of-8 batch tile; the last tile may be partial (Pallas masks
        # OOB reads / drops OOB writes; rows are independent, so this is safe).
        block_b_eff = max(8, (block_b // 8) * 8)
        num_tiles = pl.cdiv(B, block_b_eff)

    out = pl.pallas_call(
        _wordle_nn_kernel,
        out_shape=jax.ShapeDtypeStruct((B, 1), jnp.float32),
        grid=(num_tiles,),
        in_specs=[
            pl.BlockSpec((block_b_eff, F), lambda i: (i, 0)),  # x: tiled over batch
            pl.BlockSpec((F, H), lambda i: (0, 0)),            # W1^T: resident
            pl.BlockSpec((1, H), lambda i: (0, 0)),            # b1
            pl.BlockSpec((1, H), lambda i: (0, 0)),            # W2 row
            pl.BlockSpec((1, 1), lambda i: (0, 0)),            # b2
        ],
        out_specs=pl.BlockSpec((block_b_eff, 1), lambda i: (i, 0)),
        compiler_params=pltpu.CompilerParams(
            # Batch tiles are independent -> megacore-shardable on v7x.
            dimension_semantics=("parallel",),
            # Explicit scoped VMEM limit; ~1 MiB/step actual usage.
            vmem_limit_bytes=32 * 1024 * 1024,
        ),
    )(x, w1t, b1r, w2r, b2r)

    return out


def _reference_forward(x, w1, b1, w2, b2):
    xf = jnp.asarray(x, jnp.float32)
    h = jnp.maximum(xf @ jnp.asarray(w1, jnp.float32).T + b1, 0.0)
    return h @ jnp.asarray(w2, jnp.float32).T + b2


if __name__ == "__main__":
    # Shapes implied by the module: word_length=5, alphabet_length=26 -> F=130,
    # hidden_size=32.  Primary case is a small batch of 8.
    word_length = 5
    alphabet_length = 26
    hidden_size = 32
    F = word_length * alphabet_length

    key = jax.random.PRNGKey(0)
    kx, kw1, kb1, kw2, kb2 = jax.random.split(key, 5)

    bound1 = 1.0 / jnp.sqrt(jnp.float32(F))
    bound2 = 1.0 / jnp.sqrt(jnp.float32(hidden_size))
    w1 = jax.random.uniform(kw1, (hidden_size, F), jnp.float32, -bound1, bound1)
    b1 = jax.random.uniform(kb1, (hidden_size,), jnp.float32, -bound1, bound1)
    w2 = jax.random.uniform(kw2, (1, hidden_size), jnp.float32, -bound2, bound2)
    b2 = jax.random.uniform(kb2, (1,), jnp.float32, -bound2, bound2)

    # Hoisted, one-time parameter prep (no per-call transposes).
    params = prepare_wordle_params(w1, b1, w2, b2)

    # Small primary case: batch=8 (single full-array tile).
    batch = 8
    x = jax.random.normal(kx, (batch, F), dtype=jnp.float32)
    out = jax.block_until_ready(wordle_nn_forward(x, *params))
    ref = _reference_forward(x, w1, b1, w2, b2)
    assert out.shape == (batch, 1)
    assert jnp.allclose(out, ref, atol=1e-4, rtol=1e-4), "mismatch (batch=8)"

    # Multi-tile + partial-final-block case: batch not a multiple of block_b.
    batch2 = 2051
    x2 = jax.random.normal(kx, (batch2, F), dtype=jnp.float32)
    out2 = jax.block_until_ready(wordle_nn_forward(x2, *params, block_b=1024))
    ref2 = _reference_forward(x2, w1, b1, w2, b2)
    assert out2.shape == (batch2, 1)
    assert jnp.allclose(out2, ref2, atol=1e-4, rtol=1e-4), "mismatch (batch=2051)"

    print("KERNEL_OK")
</pallas_src>

<mosaic_0001>
module attributes {stable_mosaic.version = 11 : i64} {
  func.func @_wordle_nn_kernel(%arg0: i32, %arg1: memref<8x130xf32, #tpu.memory_space<vmem>>, %arg2: memref<130x32xf32, #tpu.memory_space<vmem>>, %arg3: memref<1x32xf32, #tpu.memory_space<vmem>>, %arg4: memref<1x32xf32, #tpu.memory_space<vmem>>, %arg5: memref<1x1xf32, #tpu.memory_space<vmem>>, %arg6: memref<8x1xf32, #tpu.memory_space<vmem>>) attributes {dimension_semantics = [#tpu.dimension_semantics<parallel>], iteration_bounds = array<i64: 1>, scalar_prefetch = 0 : i64, scratch_operands = 0 : i64, tpu.core_type = #tpu.core_type<tc>, window_params = [{transform_indices = @transform_0, window_bounds = array<i64: 8, 130>}, {pipeline_mode = #tpu.pipeline_mode<synchronous>, transform_indices = @transform_1, window_bounds = array<i64: 130, 32>}, {pipeline_mode = #tpu.pipeline_mode<synchronous>, transform_indices = @transform_2, window_bounds = array<i64: 1, 32>}, {pipeline_mode = #tpu.pipeline_mode<synchronous>, transform_indices = @transform_3, window_bounds = array<i64: 1, 32>}, {pipeline_mode = #tpu.pipeline_mode<synchronous>, transform_indices = @transform_4, window_bounds = array<i64: 1, 1>}, {transform_indices = @transform_5, window_bounds = array<i64: 8, 1>}]} {
    %c0 = arith.constant 0 : index
    %c0_0 = arith.constant 0 : index
    %0 = vector.load %arg1[%c0, %c0_0] : memref<8x130xf32, #tpu.memory_space<vmem>>, vector<8x130xf32>
    %c0_1 = arith.constant 0 : index
    %c0_2 = arith.constant 0 : index
    %1 = vector.load %arg2[%c0_1, %c0_2] : memref<130x32xf32, #tpu.memory_space<vmem>>, vector<130x32xf32>
    %cst = arith.constant dense<0.000000e+00> : vector<8x32xf32>
    %2 = tpu.matmul %0, %1, %cst {dimension_numbers = #tpu.dot_dimension_numbers<[1], [0], [0], [1], [0, 0, 1, 1], [], []>} : vector<8x130xf32>, vector<130x32xf32>, vector<8x32xf32> -> vector<8x32xf32>
    %c0_3 = arith.constant 0 : index
    %c0_4 = arith.constant 0 : index
    %3 = vector.load %arg3[%c0_3, %c0_4] : memref<1x32xf32, #tpu.memory_space<vmem>>, vector<1x32xf32>
    %4 = vector.broadcast %3 : vector<1x32xf32> to vector<8x32xf32>
    %5 = arith.addf %2, %4 : vector<8x32xf32>
    %cst_5 = arith.constant 0.000000e+00 : f32
    %6 = vector.broadcast %cst_5 : f32 to vector<8x32xf32>
    %7 = arith.maximumf %5, %6 : vector<8x32xf32>
    %c0_6 = arith.constant 0 : index
    %c0_7 = arith.constant 0 : index
    %8 = vector.load %arg4[%c0_6, %c0_7] : memref<1x32xf32, #tpu.memory_space<vmem>>, vector<1x32xf32>
    %9 = vector.broadcast %8 : vector<1x32xf32> to vector<8x32xf32>
    %10 = arith.mulf %7, %9 : vector<8x32xf32>
    %cst_8 = arith.constant dense<0.000000e+00> : vector<8xf32>
    %11 = vector.multi_reduction <add>, %10, %cst_8 [1] : vector<8x32xf32> to vector<8xf32>
    %12 = vector.shape_cast %11 : vector<8xf32> to vector<8x1xf32>
    %c0_9 = arith.constant 0 : index
    %c0_10 = arith.constant 0 : index
    %13 = vector.load %arg5[%c0_9, %c0_10] : memref<1x1xf32, #tpu.memory_space<vmem>>, vector<1x1xf32>
    %14 = vector.broadcast %13 : vector<1x1xf32> to vector<8x1xf32>
    %15 = arith.addf %12, %14 : vector<8x1xf32>
    %c0_11 = arith.constant 0 : index
    %c0_12 = arith.constant 0 : index
    %16 = vector.load %arg6[%c0_11, %c0_12] : memref<8x1xf32, #tpu.memory_space<vmem>>, vector<8x1xf32>
    tpu.vector_store %arg6[%c0_11, %c0_12], %15 {strides = array<i32>} : memref<8x1xf32, #tpu.memory_space<vmem>>, vector<8x1xf32>,
    return
  }
  func.func @transform_0(%arg0: i32) -> (i32, i32) {
    %c0_i32 = arith.constant 0 : i32
    %c0_i32_0 = arith.constant 0 : i32
    return %arg0, %c0_i32 : i32, i32
  }
  func.func @transform_1(%arg0: i32) -> (i32, i32) {
    %c0_i32 = arith.constant 0 : i32
    %c0_i32_0 = arith.constant 0 : i32
    %c0_i32_1 = arith.constant 0 : i32
    return %c0_i32, %c0_i32_0 : i32, i32
  }
  func.func @transform_2(%arg0: i32) -> (i32, i32) {
    %c0_i32 = arith.constant 0 : i32
    %c0_i32_0 = arith.constant 0 : i32
    %c0_i32_1 = arith.constant 0 : i32
    return %c0_i32, %c0_i32_0 : i32, i32
  }
  func.func @transform_3(%arg0: i32) -> (i32, i32) {
    %c0_i32 = arith.constant 0 : i32
    %c0_i32_0 = arith.constant 0 : i32
    %c0_i32_1 = arith.constant 0 : i32
    return %c0_i32, %c0_i32_0 : i32, i32
  }
  func.func @transform_4(%arg0: i32) -> (i32, i32) {
    %c0_i32 = arith.constant 0 : i32
    %c0_i32_0 = arith.constant 0 : i32
    %c0_i32_1 = arith.constant 0 : i32
    return %c0_i32, %c0_i32_0 : i32, i32
  }
  func.func @transform_5(%arg0: i32) -> (i32, i32) {
    %c0_i32 = arith.constant 0 : i32
    %c0_i32_0 = arith.constant 0 : i32
    return %arg0, %c0_i32 : i32, i32
  }
}

</mosaic_0001>

<llo_original>
// kernel: tpu_custom_call.1
$region0: #{tpu_custom_call.1}
  #allocation0 [shape = 'u32[]', space=smem, size = 0x4, offset = 0x4, fixed_abs, tag = 'smem constant byte address 0x4 - core index']
  #allocation1 [shape = 'u32[144,128]{1,0:T(1,128)}', space=vmem, size = 0x12000, scoped, tag = 'internal scratch']
  #allocation2 [shape = 'f32[1,1]{1,0:T(1,128)S(1)}', space=vmem, size = 0x200, scoped, tag = 'scoped memory for tpu_custom_call.1']
  %s0 = inlined_call_operand.vmem [shape: f32[8,130], index: 0, kind: input, shape index: {}]
  %s1 = inlined_call_operand.vmem [shape: f32[130,32], index: 1, kind: input, shape index: {}]
  %s2 = inlined_call_operand.vmem [shape: f32[1,32], index: 2, kind: input, shape index: {}]
  %s3 = inlined_call_operand.vmem [shape: f32[1,32], index: 3, kind: input, shape index: {}]
  %s4 = inlined_call_operand.<no memory space> [shape: f32[1,1], index: 4, kind: input, shape index: {}]
  %s5 = inlined_call_operand.vmem [shape: f32[8,1], index: 5, kind: output, shape index: {}]
  %s6 = sld [smem:[#allocation0]]
  $region30: #{tpu_custom_call.1} parent=0
    _
  %s8 = ssub.s32 1, %s6
  %s9 = scalar_select 0, %s8, %s6
  %v10 = vstv %s4
  %11 = vst [vmem:[#allocation2] sm:$0x1] %v10
  // Predicated region
  $region2: #{tpu_custom_call.1} parent=0 // pred_check
    _
  $region3: #{tpu_custom_call.1} parent=0 // pred_check_branch
    %13 = sbr.rel (0) target = $region5
  $region4: #{tpu_custom_call.1} parent=0 // pred_region
    _
  $region5: #{tpu_custom_call.1} parent=0 // pred_fallthru
    _
  // Predicated region
  $region6: #{tpu_custom_call.1} parent=0 // pred_check
    _
  $region7: #{tpu_custom_call.1} parent=0 // pred_check_branch
    %15 = sbr.rel (0) target = $region9
  $region8: #{tpu_custom_call.1} parent=0 // pred_region
    _
  $region9: #{tpu_custom_call.1} parent=0 // pred_fallthru
    _
  // Predicated region
  $region10: #{tpu_custom_call.1} parent=0 // pred_check
    _
  $region11: #{tpu_custom_call.1} parent=0 // pred_check_branch
    %17 = sbr.rel (0) target = $region13
  $region12: #{tpu_custom_call.1} parent=0 // pred_region
    _
  $region13: #{tpu_custom_call.1} parent=0 // pred_fallthru
    _
  // Predicated region
  $region14: #{tpu_custom_call.1} parent=0 // pred_check
    _
  $region15: #{tpu_custom_call.1} parent=0 // pred_check_branch
    %19 = sbr.rel (0) target = $region17
  $region16: #{tpu_custom_call.1} parent=0 // pred_region
    _
  $region17: #{tpu_custom_call.1} parent=0 // pred_fallthru
    _
  // Predicated region
  $region18: #{tpu_custom_call.1} parent=0 // pred_check
    _
  $region19: #{tpu_custom_call.1} parent=0 // pred_check_branch
    %21 = sbr.rel (0) target = $region21
  $region20: #{tpu_custom_call.1} parent=0 // pred_region
    _
  $region21: #{tpu_custom_call.1} parent=0 // pred_fallthru
    _
  %v22 = vld [vmem:[%s0] sm:$0xff]
  %v23 = vld [vmem:[%s0 + $0x8] sm:$0xff]
  %v24 = vld [vmem:[%s1] sm:$0xff]
  %v25 = vld [vmem:[%s1 + $0x8] sm:$0xff]
  %v26 = vld [vmem:[%s1 + $0x10] sm:$0xff]
  %v27 = vld [vmem:[%s1 + $0x18] sm:$0xff]
  %v28 = vld [vmem:[%s1 + $0x20] sm:$0xff]
  %v29 = vld [vmem:[%s1 + $0x28] sm:$0xff]
  %v30 = vld [vmem:[%s1 + $0x30] sm:$0xff]
  %v31 = vld [vmem:[%s1 + $0x38] sm:$0xff]
  %v32 = vld [vmem:[%s1 + $0x40] sm:$0xff]
  %v33 = vld [vmem:[%s1 + $0x48] sm:$0xff]
  %v34 = vld [vmem:[%s1 + $0x50] sm:$0xff]
  %v35 = vld [vmem:[%s1 + $0x58] sm:$0xff]
  %v36 = vld [vmem:[%s1 + $0x60] sm:$0xff]
  %v37 = vld [vmem:[%s1 + $0x68] sm:$0xff]
  %v38 = vld [vmem:[%s1 + $0x70] sm:$0xff]
  %v39 = vld [vmem:[%s1 + $0x78] sm:$0xff]
  %v40 = vld [vmem:[%s1 + $0x80] sm:$0x3]
  %v41 = vld [vmem:[%s2] sm:$0x1]
  %v43 = vlaneseq
  %v44 = vshrl.u32 %v43, 7
  %v45 = vsub.s32 0, %v44
  %v46 = vrot.slane %v41, %v45
  %vm48 = vcmask 15360
  %v50 = vsel %vm48, %v23, 0
  %vm52 = vcmask 1041408
  %v54 = vsel %vm52, %v40, 0
  %56 = vmatprep.subr.mxu0 0.0
  %57 = vmatpush1.msra.mxu0 %v24
  %58 = vmatprep.subr.mxu0 0.0
  %59 = vmatpush1.msra.mxu0 %v25
  %60 = vmatprep.subr.mxu0 0.0
  %61 = vmatpush1.msra.mxu0 %v26
  %62 = vmatprep.subr.mxu0 0.0
  %63 = vmatpush1.msra.mxu0 %v27
  %64 = vmatprep.subr.mxu0 0.0
  %65 = vmatpush1.msra.mxu0 %v28
  %66 = vmatprep.subr.mxu0 0.0
  %67 = vmatpush1.msra.mxu0 %v29
  %68 = vmatprep.subr.mxu0 0.0
  %69 = vmatpush1.msra.mxu0 %v30
  %70 = vmatprep.subr.mxu0 0.0
  %71 = vmatpush1.msra.mxu0 %v31
  %72 = vmatprep.subr.mxu0 0.0
  %73 = vmatpush1.msra.mxu0 %v32
  %74 = vmatprep.subr.mxu0 0.0
  %75 = vmatpush1.msra.mxu0 %v33
  %76 = vmatprep.subr.mxu0 0.0
  %77 = vmatpush1.msra.mxu0 %v34
  %78 = vmatprep.subr.mxu0 0.0
  %79 = vmatpush1.msra.mxu0 %v35
  %80 = vmatprep.subr.mxu0 0.0
  %81 = vmatpush1.msra.mxu0 %v36
  %82 = vmatprep.subr.mxu0 0.0
  %83 = vmatpush1.msra.mxu0 %v37
  %84 = vmatprep.subr.mxu0 0.0
  %85 = vmatpush1.msra.mxu0 %v38
  %86 = vmatprep.subr.mxu0 0.0
  %87 = vmatpush1.msra.mxu0 %v39
  %88 = vmatprep.subr.mxu0 0.0
  %89 = vmatpush1.msra.mxu0 %v54
  %90 = vmatprep.subr.mxu0 0.0
  %91 = vmatpush1.msra.mxu0 0.0
  %92 = vmatprep.subr.mxu0 0.0
  %93 = vmatpush1.msra.mxu0 0.0
  %94 = vmatprep.subr.mxu0 0.0
  %95 = vmatpush1.msra.mxu0 0.0
  %96 = vmatprep.subr.mxu0 0.0
  %97 = vmatpush1.msra.mxu0 0.0
  %98 = vmatprep.subr.mxu0 0.0
  %99 = vmatpush1.msra.mxu0 0.0
  %100 = vmatprep.subr.mxu0 0.0
  %101 = vmatpush1.msra.mxu0 0.0
  %102 = vmatprep.subr.mxu0 0.0
  %103 = vmatpush1.msra.mxu0 0.0
  %104 = vmatprep.subr.mxu0 0.0
  %105 = vmatpush1.msra.mxu0 0.0
  %106 = vmatprep.subr.mxu0 0.0
  %107 = vmatpush1.msra.mxu0 0.0
  %108 = vmatprep.subr.mxu0 0.0
  %109 = vmatpush1.msra.mxu0 0.0
  %110 = vmatprep.subr.mxu0 0.0
  %111 = vmatpush1.msra.mxu0 0.0
  %112 = vmatprep.subr.mxu0 0.0
  %113 = vmatpush1.msra.mxu0 0.0
  %114 = vmatprep.subr.mxu0 0.0
  %115 = vmatpush1.msra.mxu0 0.0
  %116 = vmatprep.subr.mxu0 0.0
  %117 = vmatpush1.msra.mxu0 0.0
  %118 = vmatprep.subr.mxu0 0.0
  %119 = vmatpush1.msra.mxu0 0.0
  %120 = vmatprep.mubr.f32.mxu0 %v50
  %121 = vmatmul.mubr.f32.gmra.mrb[0].mxu0 %v22
  %v122 = vpop.f32.mrb[0].mxu0
  %v123 = vadd.f32 %v46, %v122
  %v124 = vpop.f32.mrb[0].mxu0
  %125 = vdwg.mxu0
  %v126 = vmax.f32 %v123, 0.0
  %v127 = vld [vmem:[%s3] sm:$0x1]
  %v129 = vlaneseq
  %v130 = vshrl.u32 %v129, 7
  %v131 = vsub.s32 0, %v130
  %v132 = vrot.slane %v127, %v131
  %v134 = vmul.f32 %v126, %v132
  %vm135 = vcmask 261120
  %v136 = vsel %vm135, %v134, 0.0
  %137 = vadd.xlane.f32.xlu0 %v136
  %v138 = vpop.xlane.xlu0 %137
  %v139 = vld [vmem:[#allocation2] sm:$0x1]
  %v141 = vlaneseq
  %v142 = vshrl.u32 %v141, 7
  %v143 = vsub.s32 0, %v142
  %v144 = vrot.slane %v139, %v143
  %v146 = vadd.f32 %v138, %v144
  %vm147 = vcmask 7168
  %148 = vst.msk [vmem:[%s5] sm:$0xff] %vm147, %v146
  // Predicated region
  $region22: #{tpu_custom_call.1} parent=0 // pred_check
    _
  $region23: #{tpu_custom_call.1} parent=0 // pred_check_branch
    %150 = sbr.rel (0) target = $region25
  $region24: #{tpu_custom_call.1} parent=0 // pred_region
    _
  $region25: #{tpu_custom_call.1} parent=0 // pred_fallthru
    _
  // Predicated region
  $region26: #{tpu_custom_call.1} parent=0 // pred_check
    _
  $region27: #{tpu_custom_call.1} parent=0 // pred_check_branch
    %152 = sbr.rel (0) target = $region29
  $region28: #{tpu_custom_call.1} parent=0 // pred_region
    _
  $region29: #{tpu_custom_call.1} parent=0 // pred_fallthru
    _

</llo_original>
